<compile_context>
chip_gen: v6e
topology: v6e:2x2x1
jax: 0.10.0
libtpu: 0.0.40
codegen_flags: <defaults>
</compile_context>

<pallas_src>
import numpy as np
import jax
import jax.numpy as jnp
from jax.experimental import pallas as pl
from jax.experimental.pallas import tpu as pltpu


# ----------------------------- static skeleton ------------------------------
_SKELETON_IDX = [[[3, 2], [2, 1], [4, 5], [5, 6]],
                 [[16, 15], [15, 14], [11, 12], [12, 13]],
                 [[1, 0], [4, 0]],
                 [[14, 8], [11, 8]]]
_SKELETON_WEIGHT = [[1.0085885098415446, 1, 1, 1.0085885098415446],
                    [1.1375361376887123, 1, 1, 1.1375361376887123],
                    [1, 1],
                    [1, 1]]
_ID1 = np.array([p[0] for grp in _SKELETON_IDX for p in grp], np.int32)
_ID2 = np.array([p[1] for grp in _SKELETON_IDX for p in grp], np.int32)
_BONE_W = np.array([w for grp in _SKELETON_WEIGHT for w in grp], np.float32)
_GROUP = np.array([g for g, grp in enumerate(_SKELETON_IDX) for _ in grp], np.int32)
_NB = len(_ID1)            # 12 bones
_NG = len(_SKELETON_IDX)   # 4 groups

_CHUNK = 8                 # samples per grid step (one full sublane tile)


# --------------------------------- kernel -----------------------------------
def bone_loss_kernel(packed_ref, sd_ref, ssum_ref, gm_ref, gmt_ref, w_ref,
                     out_ref):
    # packed rows: 0=pred(depth), 1=gt x, 2=gt y, 3=visibility, 4=mask
    pred = packed_ref[0]           # (C, K)
    xx = packed_ref[1]             # (C, K)
    yy = packed_ref[2]             # (C, K)
    vis = packed_ref[3]            # (C, K)
    msk = packed_ref[4]            # (C, K)

    sd = sd_ref[...]               # (K, NB) endpoint difference selector (s1 - s2)
    ssum = ssum_ref[...]           # (K, NB) endpoint sum selector (s1 + s2)
    gm = gm_ref[...]               # (NB, NG) bone -> group one-hot
    gmt = gmt_ref[...]             # (NG, NB) group -> bone scatter (gm^T)
    w = w_ref[...]                 # (1, NB) per-bone skeleton weight

    chunk = pred.shape[0]

    # fused bone-endpoint differences for [depth; x; y] -> one MXU push
    coords = jnp.concatenate([pred, xx, yy], axis=0)                       # (3C, K)
    d = jnp.dot(coords, sd, preferred_element_type=jnp.float32)            # (3C, NB)
    dz = d[0 * chunk:1 * chunk]
    dx = d[1 * chunk:2 * chunk]
    dy = d[2 * chunk:3 * chunk]

    # both endpoints visible  <=>  (vis > 0.5) one-hot @ (s1 + s2) == 2
    # operands are exact 0/1 f32 -> the comparison against 1.5 is exact.
    vis_ind = (vis > 0.5).astype(jnp.float32)
    both = (jnp.dot(vis_ind, ssum, preferred_element_type=jnp.float32) > 1.5
            ).astype(jnp.float32)                                           # (C, NB)

    length = jnp.sqrt(dx * dx + dy * dy + dz * dz) * w * both               # (C, NB)

    # per-group visible-bone count and length sum, fused into one dot
    g = jnp.dot(jnp.concatenate([both, length], axis=0), gm,
                preferred_element_type=jnp.float32)                         # (2C, NG)
    num_g = g[:chunk]
    sum_g = g[chunk:]
    mean_g = jnp.where(num_g >= 0.5, sum_g / jnp.maximum(num_g, 1.0), 0.0)

    # scatter group stats back onto their bones, also fused into one dot
    b = jnp.dot(jnp.concatenate([num_g, mean_g], axis=0), gmt,
                preferred_element_type=jnp.float32)                         # (2C, NB)
    num_b = b[:chunk]
    mean_b = b[chunk:]

    per_bone = jnp.where(length > 0.0,
                         (length - mean_b) ** 2 * 0.5 / jnp.maximum(num_b, 1.0),
                         0.0)                                                # (C, NB)

    # VarLoss only applies to samples without 3D labels (mask all zero);
    # zero-padded samples have vis == 0 -> length == 0 -> contribute nothing.
    gate = (jnp.sum(msk, axis=-1) == 0.0).astype(jnp.float32)                # (C,)
    loss = jnp.sum(per_bone, axis=-1) * gate                                 # (C,)

    out_ref[...] = loss.reshape(1, 1, chunk)                                 # lane-dense


# -------------------------------- wrapper ------------------------------------
def bone_loss(output, mask, ind, target, gt_2d, var_weight=1.0):
    """Forward pass of Bone_loss (gather + VarLoss(var_weight))."""
    B, C, H, W = output.shape
    assert C == 1, "bone/depth head emits a single channel"
    HW = H * W
    K = ind.shape[1]
    assert K > int(max(_ID1.max(), _ID2.max())), "skeleton needs >= 17 joints"

    # Gather hoisted out of the kernel (perf review): XLA handles this fine and
    # it removes the B*HW DMA + HW-wide one-hot from the kernel entirely.
    feat = jnp.transpose(output, (0, 2, 3, 1)).reshape(B, HW).astype(jnp.float32)
    pred = jnp.take_along_axis(feat, ind.astype(jnp.int32), axis=1)          # (B, K)

    xy = gt_2d.astype(jnp.float32).reshape(B, K, 2)
    vis = target.astype(jnp.float32).reshape(B, K)
    msk = mask.astype(jnp.float32).reshape(B, K)

    # One packed per-sample tensor -> a single DMA per grid step.
    packed = jnp.stack([pred, xy[..., 0], xy[..., 1], vis, msk], axis=0)     # (5, B, K)
    num_chunks = -(-B // _CHUNK)
    B_pad = num_chunks * _CHUNK
    if B_pad != B:
        packed = jnp.pad(packed, ((0, 0), (0, B_pad - B), (0, 0)))

    # static skeleton selector matrices (0/±1, exact through the MXU in f32)
    s1 = np.zeros((K, _NB), np.float32); s1[_ID1, np.arange(_NB)] = 1.0
    s2 = np.zeros((K, _NB), np.float32); s2[_ID2, np.arange(_NB)] = 1.0
    sd = jnp.asarray(s1 - s2)
    ssum = jnp.asarray(s1 + s2)
    gm_np = np.zeros((_NB, _NG), np.float32); gm_np[np.arange(_NB), _GROUP] = 1.0
    gm = jnp.asarray(gm_np)
    gmt = jnp.asarray(gm_np.T)
    w_row = jnp.asarray(_BONE_W.reshape(1, _NB))

    per_chunk = pl.pallas_call(
        bone_loss_kernel,
        out_shape=jax.ShapeDtypeStruct((num_chunks, 1, _CHUNK), jnp.float32),
        grid=(num_chunks,),
        in_specs=[
            pl.BlockSpec((5, _CHUNK, K), lambda b: (0, b, 0)),   # packed per-sample data
            pl.BlockSpec((K, _NB), lambda b: (0, 0)),            # difference selector
            pl.BlockSpec((K, _NB), lambda b: (0, 0)),            # sum selector
            pl.BlockSpec((_NB, _NG), lambda b: (0, 0)),          # bone -> group
            pl.BlockSpec((_NG, _NB), lambda b: (0, 0)),          # group -> bone
            pl.BlockSpec((1, _NB), lambda b: (0, 0)),            # bone weights
        ],
        out_specs=pl.BlockSpec((1, 1, _CHUNK), lambda b: (b, 0, 0)),
        compiler_params=pltpu.CompilerParams(
            dimension_semantics=("parallel",)),
        cost_estimate=pl.CostEstimate(
            flops=int(2 * B_pad * K * _NB * 4          # coord + vis selector dots
                      + 2 * 4 * B_pad * _NB * _NG      # group gather / scatter dots
                      + 24 * B_pad * _NB),             # elementwise bone math
            transcendentals=int(B_pad * _NB),
            bytes_accessed=int(4 * (5 * B_pad * K + 2 * K * _NB
                                    + 2 * _NB * _NG + _NB + B_pad)),
        ),
    )(packed, sd, ssum, gm, gmt, w_row)

    # final mean over the batch stays outside the kernel so the batch grid axis
    # remains "parallel" (per perf review); padded samples contribute 0.
    return var_weight * jnp.sum(per_chunk) / B


# --------------------------- pure numpy reference ----------------------------
def _reference(output, mask, ind, target, gt_2d, var_weight=1.0):
    output = np.asarray(output, np.float64)
    mask = np.asarray(mask, np.float64)
    ind = np.asarray(ind)
    target = np.asarray(target, np.float64)
    gt_2d = np.asarray(gt_2d, np.float64)
    B = output.shape[0]
    feat = np.transpose(output, (0, 2, 3, 1)).reshape(B, -1)
    pred = np.take_along_axis(feat, ind, axis=1)
    xy = gt_2d.reshape(B, -1, 2)
    total = 0.0
    for t in range(B):
        if mask[t].sum() == 0:
            for g in range(len(_SKELETON_IDX)):
                E, num = 0.0, 0
                N = len(_SKELETON_IDX[g])
                l = np.zeros(N)
                for j in range(N):
                    id1, id2 = _SKELETON_IDX[g][j]
                    if target[t, id1] > 0.5 and target[t, id2] > 0.5:
                        l[j] = (((xy[t, id1] - xy[t, id2]) ** 2).sum()
                                + (pred[t, id1] - pred[t, id2]) ** 2) ** 0.5
                        l[j] = l[j] * _SKELETON_WEIGHT[g][j]
                        num += 1
                        E += l[j]
                E = 0 if num < 0.5 else E / num
                loss = 0.0
                for j in range(N):
                    if l[j] > 0:
                        loss += (l[j] - E) ** 2 / 2.0 / num
                total += loss
    return var_weight * total / B


if __name__ == "__main__":
    key = jax.random.PRNGKey(0)

    # ---- test 1: B=2 (exercises padding to one CHUNK of 8) ----
    k1, k2, k3 = jax.random.split(key, 3)
    B, H, W, K = 2, 16, 16, 17
    output = jax.random.normal(k1, (B, 1, H, W), dtype=jnp.float32)
    ind = jax.random.randint(k2, (B, K), 0, H * W, dtype=jnp.int32)
    gt_2d = jax.random.uniform(k3, (B, K, 2), dtype=jnp.float32) * 64.0
    target = jnp.ones((B, K), jnp.float32)
    target = target.at[0, 6].set(0.0)
    target = target.at[1, 0].set(0.0)
    mask = jnp.zeros((B, K), jnp.float32)      # sample 0: VarLoss active
    mask = mask.at[1].set(1.0)                 # sample 1: has 3D labels -> skipped

    loss = jax.block_until_ready(bone_loss(output, mask, ind, target, gt_2d))
    ref = _reference(output, mask, ind, target, gt_2d)
    assert np.allclose(float(loss), ref, rtol=1e-4, atol=1e-3), (float(loss), ref)

    # ---- test 2: B=10 (two grid steps, mixed masks / visibility) ----
    k4, k5, k6, k7, k8 = jax.random.split(key, 5)
    B2 = 10
    output2 = jax.random.normal(k4, (B2, 1, H, W), dtype=jnp.float32)
    ind2 = jax.random.randint(k5, (B2, K), 0, H * W, dtype=jnp.int32)
    gt_2d2 = jax.random.uniform(k6, (B2, K, 2), dtype=jnp.float32) * 64.0
    target2 = (jax.random.uniform(k7, (B2, K)) > 0.2).astype(jnp.float32)
    mask2 = jnp.zeros((B2, K), jnp.float32)
    has_3d = jax.random.uniform(k8, (B2,)) > 0.5
    mask2 = jnp.where(has_3d[:, None], 1.0, mask2)

    loss2 = jax.block_until_ready(bone_loss(output2, mask2, ind2, target2, gt_2d2))
    ref2 = _reference(output2, mask2, ind2, target2, gt_2d2)
    assert np.allclose(float(loss2), ref2, rtol=1e-4, atol=1e-3), (float(loss2), ref2)

    print("KERNEL_OK")
</pallas_src>

<mosaic_0001>
module attributes {stable_mosaic.version = 11 : i64} {
  func.func @bone_loss_kernel(%arg0: i32, %arg1: memref<5x8x17xf32, #tpu.memory_space<vmem>>, %arg2: memref<17x12xf32, #tpu.memory_space<vmem>>, %arg3: memref<17x12xf32, #tpu.memory_space<vmem>>, %arg4: memref<12x4xf32, #tpu.memory_space<vmem>>, %arg5: memref<4x12xf32, #tpu.memory_space<vmem>>, %arg6: memref<1x12xf32, #tpu.memory_space<vmem>>, %arg7: memref<1x1x8xf32, #tpu.memory_space<vmem>>) attributes {dimension_semantics = [#tpu.dimension_semantics<parallel>], iteration_bounds = array<i64: 1>, scalar_prefetch = 0 : i64, scratch_operands = 0 : i64, tpu.core_type = #tpu.core_type<tc>, window_params = [{transform_indices = @transform_0, window_bounds = array<i64: 5, 8, 17>}, {pipeline_mode = #tpu.pipeline_mode<synchronous>, transform_indices = @transform_1, window_bounds = array<i64: 17, 12>}, {pipeline_mode = #tpu.pipeline_mode<synchronous>, transform_indices = @transform_2, window_bounds = array<i64: 17, 12>}, {pipeline_mode = #tpu.pipeline_mode<synchronous>, transform_indices = @transform_3, window_bounds = array<i64: 12, 4>}, {pipeline_mode = #tpu.pipeline_mode<synchronous>, transform_indices = @transform_4, window_bounds = array<i64: 4, 12>}, {pipeline_mode = #tpu.pipeline_mode<synchronous>, transform_indices = @transform_5, window_bounds = array<i64: 1, 12>}, {transform_indices = @transform_6, window_bounds = array<i64: 1, 1, 8>}]} {
    %c0 = arith.constant 0 : index
    %c0_0 = arith.constant 0 : index
    %c0_1 = arith.constant 0 : index
    %0 = vector.load %arg1[%c0, %c0_0, %c0_1] : memref<5x8x17xf32, #tpu.memory_space<vmem>>, vector<1x8x17xf32>
    %1 = vector.shape_cast %0 : vector<1x8x17xf32> to vector<8x17xf32>
    %c1 = arith.constant 1 : index
    %c0_2 = arith.constant 0 : index
    %c0_3 = arith.constant 0 : index
    %2 = vector.load %arg1[%c1, %c0_2, %c0_3] : memref<5x8x17xf32, #tpu.memory_space<vmem>>, vector<1x8x17xf32>
    %3 = vector.shape_cast %2 : vector<1x8x17xf32> to vector<8x17xf32>
    %c2 = arith.constant 2 : index
    %c0_4 = arith.constant 0 : index
    %c0_5 = arith.constant 0 : index
    %4 = vector.load %arg1[%c2, %c0_4, %c0_5] : memref<5x8x17xf32, #tpu.memory_space<vmem>>, vector<1x8x17xf32>
    %5 = vector.shape_cast %4 : vector<1x8x17xf32> to vector<8x17xf32>
    %c3 = arith.constant 3 : index
    %c0_6 = arith.constant 0 : index
    %c0_7 = arith.constant 0 : index
    %6 = vector.load %arg1[%c3, %c0_6, %c0_7] : memref<5x8x17xf32, #tpu.memory_space<vmem>>, vector<1x8x17xf32>
    %7 = vector.shape_cast %6 : vector<1x8x17xf32> to vector<8x17xf32>
    %c4 = arith.constant 4 : index
    %c0_8 = arith.constant 0 : index
    %c0_9 = arith.constant 0 : index
    %8 = vector.load %arg1[%c4, %c0_8, %c0_9] : memref<5x8x17xf32, #tpu.memory_space<vmem>>, vector<1x8x17xf32>
    %9 = vector.shape_cast %8 : vector<1x8x17xf32> to vector<8x17xf32>
    %c0_10 = arith.constant 0 : index
    %c0_11 = arith.constant 0 : index
    %10 = vector.load %arg2[%c0_10, %c0_11] : memref<17x12xf32, #tpu.memory_space<vmem>>, vector<17x12xf32>
    %c0_12 = arith.constant 0 : index
    %c0_13 = arith.constant 0 : index
    %11 = vector.load %arg3[%c0_12, %c0_13] : memref<17x12xf32, #tpu.memory_space<vmem>>, vector<17x12xf32>
    %c0_14 = arith.constant 0 : index
    %c0_15 = arith.constant 0 : index
    %12 = vector.load %arg4[%c0_14, %c0_15] : memref<12x4xf32, #tpu.memory_space<vmem>>, vector<12x4xf32>
    %c0_16 = arith.constant 0 : index
    %c0_17 = arith.constant 0 : index
    %13 = vector.load %arg5[%c0_16, %c0_17] : memref<4x12xf32, #tpu.memory_space<vmem>>, vector<4x12xf32>
    %c0_18 = arith.constant 0 : index
    %c0_19 = arith.constant 0 : index
    %14 = vector.load %arg6[%c0_18, %c0_19] : memref<1x12xf32, #tpu.memory_space<vmem>>, vector<1x12xf32>
    %15 = tpu.concatenate %1, %3, %5 in 0 : vector<8x17xf32>, vector<8x17xf32>, vector<8x17xf32> -> vector<24x17xf32>
    %cst = arith.constant dense<0.000000e+00> : vector<24x12xf32>
    %16 = tpu.matmul %15, %10, %cst {dimension_numbers = #tpu.dot_dimension_numbers<[1], [0], [0], [1], [0, 0, 1, 1], [], []>} : vector<24x17xf32>, vector<17x12xf32>, vector<24x12xf32> -> vector<24x12xf32>
    %17 = vector.extract_strided_slice %16 {offsets = [0, 0], sizes = [8, 12], strides = [1, 1]} : vector<24x12xf32> to vector<8x12xf32>
    %18 = vector.extract_strided_slice %16 {offsets = [8, 0], sizes = [8, 12], strides = [1, 1]} : vector<24x12xf32> to vector<8x12xf32>
    %19 = vector.extract_strided_slice %16 {offsets = [16, 0], sizes = [8, 12], strides = [1, 1]} : vector<24x12xf32> to vector<8x12xf32>
    %cst_20 = arith.constant 5.000000e-01 : f32
    %20 = vector.broadcast %cst_20 : f32 to vector<8x17xf32>
    %21 = arith.cmpf ogt, %7, %20 : vector<8x17xf32>
    %22 = arith.extui %21 : vector<8x17xi1> to vector<8x17xi32>
    %23 = arith.sitofp %22 : vector<8x17xi32> to vector<8x17xf32>
    %cst_21 = arith.constant dense<0.000000e+00> : vector<8x12xf32>
    %24 = tpu.matmul %23, %11, %cst_21 {dimension_numbers = #tpu.dot_dimension_numbers<[1], [0], [0], [1], [0, 0, 1, 1], [], []>} : vector<8x17xf32>, vector<17x12xf32>, vector<8x12xf32> -> vector<8x12xf32>
    %cst_22 = arith.constant 1.500000e+00 : f32
    %25 = vector.broadcast %cst_22 : f32 to vector<8x12xf32>
    %26 = arith.cmpf ogt, %24, %25 : vector<8x12xf32>
    %27 = arith.extui %26 : vector<8x12xi1> to vector<8x12xi32>
    %28 = arith.sitofp %27 : vector<8x12xi32> to vector<8x12xf32>
    %29 = arith.mulf %18, %18 : vector<8x12xf32>
    %30 = arith.mulf %19, %19 : vector<8x12xf32>
    %31 = arith.addf %29, %30 : vector<8x12xf32>
    %32 = arith.mulf %17, %17 : vector<8x12xf32>
    %33 = arith.addf %31, %32 : vector<8x12xf32>
    %34 = math.sqrt %33 : vector<8x12xf32>
    %35 = vector.broadcast %14 : vector<1x12xf32> to vector<8x12xf32>
    %36 = arith.mulf %34, %35 : vector<8x12xf32>
    %37 = arith.mulf %36, %28 : vector<8x12xf32>
    %38 = tpu.concatenate %28, %37 in 0 : vector<8x12xf32>, vector<8x12xf32> -> vector<16x12xf32>
    %cst_23 = arith.constant dense<0.000000e+00> : vector<16x4xf32>
    %39 = tpu.matmul %38, %12, %cst_23 {dimension_numbers = #tpu.dot_dimension_numbers<[1], [0], [0], [1], [0, 0, 1, 1], [], []>} : vector<16x12xf32>, vector<12x4xf32>, vector<16x4xf32> -> vector<16x4xf32>
    %40 = vector.extract_strided_slice %39 {offsets = [0, 0], sizes = [8, 4], strides = [1, 1]} : vector<16x4xf32> to vector<8x4xf32>
    %41 = vector.extract_strided_slice %39 {offsets = [8, 0], sizes = [8, 4], strides = [1, 1]} : vector<16x4xf32> to vector<8x4xf32>
    %cst_24 = arith.constant 5.000000e-01 : f32
    %42 = vector.broadcast %cst_24 : f32 to vector<8x4xf32>
    %43 = arith.cmpf oge, %40, %42 : vector<8x4xf32>
    %cst_25 = arith.constant 1.000000e+00 : f32
    %44 = vector.broadcast %cst_25 : f32 to vector<8x4xf32>
    %45 = arith.maximumf %40, %44 : vector<8x4xf32>
    %46 = arith.divf %41, %45 : vector<8x4xf32>
    %cst_26 = arith.constant 0.000000e+00 : f32
    %47 = vector.broadcast %cst_26 : f32 to vector<8x4xf32>
    %48 = arith.select %43, %46, %47 : vector<8x4xi1>, vector<8x4xf32>
    %49 = tpu.concatenate %40, %48 in 0 : vector<8x4xf32>, vector<8x4xf32> -> vector<16x4xf32>
    %cst_27 = arith.constant dense<0.000000e+00> : vector<16x12xf32>
    %50 = tpu.matmul %49, %13, %cst_27 {dimension_numbers = #tpu.dot_dimension_numbers<[1], [0], [0], [1], [0, 0, 1, 1], [], []>} : vector<16x4xf32>, vector<4x12xf32>, vector<16x12xf32> -> vector<16x12xf32>
    %51 = vector.extract_strided_slice %50 {offsets = [0, 0], sizes = [8, 12], strides = [1, 1]} : vector<16x12xf32> to vector<8x12xf32>
    %52 = vector.extract_strided_slice %50 {offsets = [8, 0], sizes = [8, 12], strides = [1, 1]} : vector<16x12xf32> to vector<8x12xf32>
    %cst_28 = arith.constant 0.000000e+00 : f32
    %53 = vector.broadcast %cst_28 : f32 to vector<8x12xf32>
    %54 = arith.cmpf ogt, %37, %53 : vector<8x12xf32>
    %55 = arith.subf %37, %52 : vector<8x12xf32>
    %56 = arith.mulf %55, %55 : vector<8x12xf32>
    %cst_29 = arith.constant 5.000000e-01 : f32
    %57 = vector.broadcast %cst_29 : f32 to vector<8x12xf32>
    %58 = arith.mulf %56, %57 : vector<8x12xf32>
    %cst_30 = arith.constant 1.000000e+00 : f32
    %59 = vector.broadcast %cst_30 : f32 to vector<8x12xf32>
    %60 = arith.maximumf %51, %59 : vector<8x12xf32>
    %61 = arith.divf %58, %60 : vector<8x12xf32>
    %cst_31 = arith.constant 0.000000e+00 : f32
    %62 = vector.broadcast %cst_31 : f32 to vector<8x12xf32>
    %63 = arith.select %54, %61, %62 : vector<8x12xi1>, vector<8x12xf32>
    %cst_32 = arith.constant dense<0.000000e+00> : vector<8xf32>
    %64 = vector.multi_reduction <add>, %9, %cst_32 [1] : vector<8x17xf32> to vector<8xf32>
    %cst_33 = arith.constant 0.000000e+00 : f32
    %65 = vector.broadcast %cst_33 : f32 to vector<8xf32>
    %66 = arith.cmpf oeq, %64, %65 : vector<8xf32>
    %67 = arith.extui %66 : vector<8xi1> to vector<8xi32>
    %68 = arith.sitofp %67 : vector<8xi32> to vector<8xf32>
    %cst_34 = arith.constant dense<0.000000e+00> : vector<8xf32>
    %69 = vector.multi_reduction <add>, %63, %cst_34 [1] : vector<8x12xf32> to vector<8xf32>
    %70 = arith.mulf %69, %68 : vector<8xf32>
    %71 = vector.shape_cast %70 : vector<8xf32> to vector<1x1x8xf32>
    %c0_35 = arith.constant 0 : index
    %c0_36 = arith.constant 0 : index
    %c0_37 = arith.constant 0 : index
    %72 = vector.load %arg7[%c0_35, %c0_36, %c0_37] : memref<1x1x8xf32, #tpu.memory_space<vmem>>, vector<1x1x8xf32>
    tpu.vector_store %arg7[%c0_35, %c0_36, %c0_37], %71 {strides = array<i32>} : memref<1x1x8xf32, #tpu.memory_space<vmem>>, vector<1x1x8xf32>,
    return
  }
  func.func @transform_0(%arg0: i32) -> (i32, i32, i32) {
    %c0_i32 = arith.constant 0 : i32
    %c0_i32_0 = arith.constant 0 : i32
    %c0_i32_1 = arith.constant 0 : i32
    return %c0_i32, %arg0, %c0_i32_0 : i32, i32, i32
  }
  func.func @transform_1(%arg0: i32) -> (i32, i32) {
    %c0_i32 = arith.constant 0 : i32
    %c0_i32_0 = arith.constant 0 : i32
    %c0_i32_1 = arith.constant 0 : i32
    return %c0_i32, %c0_i32_0 : i32, i32
  }
  func.func @transform_2(%arg0: i32) -> (i32, i32) {
    %c0_i32 = arith.constant 0 : i32
    %c0_i32_0 = arith.constant 0 : i32
    %c0_i32_1 = arith.constant 0 : i32
    return %c0_i32, %c0_i32_0 : i32, i32
  }
  func.func @transform_3(%arg0: i32) -> (i32, i32) {
    %c0_i32 = arith.constant 0 : i32
    %c0_i32_0 = arith.constant 0 : i32
    %c0_i32_1 = arith.constant 0 : i32
    return %c0_i32, %c0_i32_0 : i32, i32
  }
  func.func @transform_4(%arg0: i32) -> (i32, i32) {
    %c0_i32 = arith.constant 0 : i32
    %c0_i32_0 = arith.constant 0 : i32
    %c0_i32_1 = arith.constant 0 : i32
    return %c0_i32, %c0_i32_0 : i32, i32
  }
  func.func @transform_5(%arg0: i32) -> (i32, i32) {
    %c0_i32 = arith.constant 0 : i32
    %c0_i32_0 = arith.constant 0 : i32
    %c0_i32_1 = arith.constant 0 : i32
    return %c0_i32, %c0_i32_0 : i32, i32
  }
  func.func @transform_6(%arg0: i32) -> (i32, i32, i32) {
    %c0_i32 = arith.constant 0 : i32
    %c0_i32_0 = arith.constant 0 : i32
    %c0_i32_1 = arith.constant 0 : i32
    return %arg0, %c0_i32, %c0_i32_0 : i32, i32, i32
  }
}

</mosaic_0001>

<llo_original>
// kernel: tpu_custom_call.1
$region0: #{tpu_custom_call.1}
  #allocation0 [shape = 'u32[]', space=smem, size = 0x4, offset = 0x4, fixed_abs, tag = 'smem constant byte address 0x4 - core index']
  #allocation1 [shape = 'u32[144,128]{1,0:T(1,128)}', space=vmem, size = 0x12000, scoped, tag = 'internal scratch']
  %s0 = inlined_call_operand.vmem [shape: f32[5,8,17], index: 0, kind: input, shape index: {}]
  %s1 = inlined_call_operand.vmem [shape: f32[17,12], index: 1, kind: input, shape index: {}]
  %s2 = inlined_call_operand.vmem [shape: f32[17,12], index: 2, kind: input, shape index: {}]
  %s3 = inlined_call_operand.vmem [shape: f32[12,4], index: 3, kind: input, shape index: {}]
  %s4 = inlined_call_operand.vmem [shape: f32[4,12], index: 4, kind: input, shape index: {}]
  %s5 = inlined_call_operand.vmem [shape: f32[1,12], index: 5, kind: input, shape index: {}]
  %s6 = inlined_call_operand.hbm [shape: f32[1,1,8], index: 6, kind: output, shape index: {}]
  %s7 = sld [smem:[#allocation0]]
  $region34: #{tpu_custom_call.1} parent=0
    _
  %s9 = ssub.s32 1, %s7
  %s10 = scalar_select 0, %s9, %s7
  $region1: #{tpu_custom_call.1} parent=0
    #allocation2 [shape = 'u8[512]{0}', space=vmem, size = 0x400, scoped, tag = 'output window, operand 0, single buffered']
    #allocation3 [shape = 's32[1]{0}', space=sflag, size = 0x4, scoped, tag = 'scoped memory for tpu_custom_call.1']
    %11 = vsyncpa [#allocation3], 0
    // Predicated region
    $region2: #{tpu_custom_call.1} parent=1 // pred_check
      _
    $region3: #{tpu_custom_call.1} parent=1 // pred_check_branch
      %13 = sbr.rel (0) target = $region5
    $region4: #{tpu_custom_call.1} parent=1 // pred_region
      _
    $region5: #{tpu_custom_call.1} parent=1 // pred_fallthru
      _
    // Predicated region
    $region6: #{tpu_custom_call.1} parent=1 // pred_check
      _
    $region7: #{tpu_custom_call.1} parent=1 // pred_check_branch
      %15 = sbr.rel (0) target = $region9
    $region8: #{tpu_custom_call.1} parent=1 // pred_region
      _
    $region9: #{tpu_custom_call.1} parent=1 // pred_fallthru
      _
    // Predicated region
    $region10: #{tpu_custom_call.1} parent=1 // pred_check
      _
    $region11: #{tpu_custom_call.1} parent=1 // pred_check_branch
      %17 = sbr.rel (0) target = $region13
    $region12: #{tpu_custom_call.1} parent=1 // pred_region
      _
    $region13: #{tpu_custom_call.1} parent=1 // pred_fallthru
      _
    // Predicated region
    $region14: #{tpu_custom_call.1} parent=1 // pred_check
      _
    $region15: #{tpu_custom_call.1} parent=1 // pred_check_branch
      %19 = sbr.rel (0) target = $region17
    $region16: #{tpu_custom_call.1} parent=1 // pred_region
      _
    $region17: #{tpu_custom_call.1} parent=1 // pred_fallthru
      _
    // Predicated region
    $region18: #{tpu_custom_call.1} parent=1 // pred_check
      _
    $region19: #{tpu_custom_call.1} parent=1 // pred_check_branch
      %21 = sbr.rel (0) target = $region21
    $region20: #{tpu_custom_call.1} parent=1 // pred_region
      _
    $region21: #{tpu_custom_call.1} parent=1 // pred_fallthru
      _
    // Predicated region
    $region22: #{tpu_custom_call.1} parent=1 // pred_check
      _
    $region23: #{tpu_custom_call.1} parent=1 // pred_check_branch
      %23 = sbr.rel (0) target = $region25
    $region24: #{tpu_custom_call.1} parent=1 // pred_region
      _
    $region25: #{tpu_custom_call.1} parent=1 // pred_fallthru
      _
    %v24 = vld [vmem:[%s0] sm:$0xff]
    %s25 = scalar_lea.vmem %s0, 8
    %v26 = vld [vmem:[%s25] sm:$0xff]
    %s27 = scalar_lea.vmem %s0, 16
    %v28 = vld [vmem:[%s27] sm:$0xff]
    %s29 = scalar_lea.vmem %s0, 24
    %v30 = vld [vmem:[%s29] sm:$0xff]
    %s31 = scalar_lea.vmem %s0, 32
    %v32 = vld [vmem:[%s31] sm:$0xff]
    %v33 = vld [vmem:[%s1] sm:$0xff]
    %v34 = vld [vmem:[%s1 + $0x8] sm:$0xff]
    %v35 = vld [vmem:[%s1 + $0x10] sm:$0x1]
    %v36 = vld [vmem:[%s2] sm:$0xff]
    %v37 = vld [vmem:[%s2 + $0x8] sm:$0xff]
    %v38 = vld [vmem:[%s2 + $0x10] sm:$0x1]
    %v39 = vld [vmem:[%s3] sm:$0xff]
    %v40 = vld [vmem:[%s3 + $0x8] sm:$0xf]
    %v41 = vld [vmem:[%s4] sm:$0xf]
    %v42 = vld [vmem:[%s5] sm:$0x1]
    %vm43 = vcmask 138240
    %v45 = vsel %vm43, %v24, 0
    %v48 = vsel %vm43, %v26, 0
    %v51 = vsel %vm43, %v28, 0
    %vm53 = vcmask 1040384
    %v55 = vsel %vm53, %v35, 0
    %57 = vmatprep.subr.mxu0 0.0
    %58 = vmatpush1.msra.mxu0 0.0
    %59 = vmatprep.subr.mxu0 0.0
    %60 = vmatpush1.msra.mxu0 0.0
    %61 = vmatprep.subr.mxu0 0.0
    %62 = vmatpush1.msra.mxu0 0.0
    %63 = vmatprep.subr.mxu0 0.0
    %64 = vmatpush1.msra.mxu0 0.0
    %65 = vmatprep.subr.mxu0 0.0
    %66 = vmatpush1.msra.mxu0 0.0
    %67 = vmatprep.subr.mxu0 0.0
    %68 = vmatpush1.msra.mxu0 0.0
    %69 = vmatprep.subr.mxu0 0.0
    %70 = vmatpush1.msra.mxu0 0.0
    %71 = vmatprep.subr.mxu0 0.0
    %72 = vmatpush1.msra.mxu0 0.0
    %73 = vmatprep.subr.mxu0 0.0
    %74 = vmatpush1.msra.mxu0 0.0
    %75 = vmatprep.subr.mxu0 0.0
    %76 = vmatpush1.msra.mxu0 0.0
    %77 = vmatprep.subr.mxu0 0.0
    %78 = vmatpush1.msra.mxu0 0.0
    %79 = vmatprep.subr.mxu0 0.0
    %80 = vmatpush1.msra.mxu0 0.0
    %81 = vmatprep.subr.mxu0 0.0
    %82 = vmatpush1.msra.mxu0 0.0
    %83 = vmatprep.subr.mxu0 0.0
    %84 = vmatpush1.msra.mxu0 %v55
    %85 = vmatprep.subr.mxu0 0.0
    %86 = vmatpush1.msra.mxu0 %v34
    %87 = vmatprep.subr.mxu0 0.0
    %88 = vmatpush1.msra.mxu0 %v33
    %89 = vmatprep.subr.mxu0 0.0
    %90 = vmatpush2.msra.mxu0 0.0
    %91 = vmatprep.subr.mxu0 0.0
    %92 = vmatpush2.msra.mxu0 0.0
    %93 = vmatprep.subr.mxu0 0.0
    %94 = vmatpush2.msra.mxu0 0.0
    %95 = vmatprep.subr.mxu0 0.0
    %96 = vmatpush2.msra.mxu0 0.0
    %97 = vmatprep.subr.mxu0 0.0
    %98 = vmatpush2.msra.mxu0 0.0
    %99 = vmatprep.subr.mxu0 0.0
    %100 = vmatpush2.msra.mxu0 0.0
    %101 = vmatprep.subr.mxu0 0.0
    %102 = vmatpush2.msra.mxu0 0.0
    %103 = vmatprep.subr.mxu0 0.0
    %104 = vmatpush2.msra.mxu0 0.0
    %105 = vmatprep.subr.mxu0 0.0
    %106 = vmatpush2.msra.mxu0 0.0
    %107 = vmatprep.subr.mxu0 0.0
    %108 = vmatpush2.msra.mxu0 0.0
    %109 = vmatprep.subr.mxu0 0.0
    %110 = vmatpush2.msra.mxu0 0.0
    %111 = vmatprep.subr.mxu0 0.0
    %112 = vmatpush2.msra.mxu0 0.0
    %113 = vmatprep.subr.mxu0 0.0
    %114 = vmatpush2.msra.mxu0 0.0
    %115 = vmatprep.subr.mxu0 0.0
    %116 = vmatpush2.msra.mxu0 0.0
    %117 = vmatprep.subr.mxu0 0.0
    %118 = vmatpush2.msra.mxu0 0.0
    %119 = vmatprep.subr.mxu0 0.0
    %120 = vmatpush2.msra.mxu0 0.0
    %121 = vmatprep.mubr.f32.mxu0 0.0
    %122 = vmatmul.mubr.f32.gmra.mxu0 %v45
    %v123 = vpop.f32.mrf.mxu0
    %v124 = vadd.f32 0.0, %v123
    %v125 = vpop.f32.mrf.mxu0
    %126 = vmatprep.mubr.f32.mxu0 0.0
    %127 = vmatmul.mubr.f32.gmra.mxu0 %v48
    %v128 = vpop.f32.mrf.mxu0
    %v129 = vadd.f32 0.0, %v128
    %v130 = vpop.f32.mrf.mxu0
    %131 = vmatprep.mubr.f32.mxu0 0.0
    %132 = vmatmul.mubr.f32.gmra.mxu0 %v51
    %v133 = vpop.f32.mrf.mxu0
    %v134 = vadd.f32 0.0, %v133
    %v135 = vpop.f32.mrf.mxu0
    %136 = vdwg.mxu0
    %vm137 = vcmp.gt.f32.partialorder %v30, 0.5
    %v138 = vsel %vm137, 1, 0
    %v139 = vcvt.s32.f32 %v138
    %v141 = vsel %vm43, %v139, 0
    %v144 = vsel %vm53, %v38, 0
    %146 = vmatprep.subr.mxu0 0.0
    %147 = vmatpush1.msra.mxu0 0.0
    %148 = vmatprep.subr.mxu0 0.0
    %149 = vmatpush1.msra.mxu0 0.0
    %150 = vmatprep.subr.mxu0 0.0
    %151 = vmatpush1.msra.mxu0 0.0
    %152 = vmatprep.subr.mxu0 0.0
    %153 = vmatpush1.msra.mxu0 0.0
    %154 = vmatprep.subr.mxu0 0.0
    %155 = vmatpush1.msra.mxu0 0.0
    %156 = vmatprep.subr.mxu0 0.0
    %157 = vmatpush1.msra.mxu0 0.0
    %158 = vmatprep.subr.mxu0 0.0
    %159 = vmatpush1.msra.mxu0 0.0
    %160 = vmatprep.subr.mxu0 0.0
    %161 = vmatpush1.msra.mxu0 0.0
    %162 = vmatprep.subr.mxu0 0.0
    %163 = vmatpush1.msra.mxu0 0.0
    %164 = vmatprep.subr.mxu0 0.0
    %165 = vmatpush1.msra.mxu0 0.0
    %166 = vmatprep.subr.mxu0 0.0
    %167 = vmatpush1.msra.mxu0 0.0
    %168 = vmatprep.subr.mxu0 0.0
    %169 = vmatpush1.msra.mxu0 0.0
    %170 = vmatprep.subr.mxu0 0.0
    %171 = vmatpush1.msra.mxu0 0.0
    %172 = vmatprep.subr.mxu0 0.0
    %173 = vmatpush1.msra.mxu0 %v144
    %174 = vmatprep.subr.mxu0 0.0
    %175 = vmatpush1.msra.mxu0 %v37
    %176 = vmatprep.subr.mxu0 0.0
    %177 = vmatpush1.msra.mxu0 %v36
    %178 = vmatprep.subr.mxu0 0.0
    %179 = vmatpush2.msra.mxu0 0.0
    %180 = vmatprep.subr.mxu0 0.0
    %181 = vmatpush2.msra.mxu0 0.0
    %182 = vmatprep.subr.mxu0 0.0
    %183 = vmatpush2.msra.mxu0 0.0
    %184 = vmatprep.subr.mxu0 0.0
    %185 = vmatpush2.msra.mxu0 0.0
    %186 = vmatprep.subr.mxu0 0.0
    %187 = vmatpush2.msra.mxu0 0.0
    %188 = vmatprep.subr.mxu0 0.0
    %189 = vmatpush2.msra.mxu0 0.0
    %190 = vmatprep.subr.mxu0 0.0
    %191 = vmatpush2.msra.mxu0 0.0
    %192 = vmatprep.subr.mxu0 0.0
    %193 = vmatpush2.msra.mxu0 0.0
    %194 = vmatprep.subr.mxu0 0.0
    %195 = vmatpush2.msra.mxu0 0.0
    %196 = vmatprep.subr.mxu0 0.0
    %197 = vmatpush2.msra.mxu0 0.0
    %198 = vmatprep.subr.mxu0 0.0
    %199 = vmatpush2.msra.mxu0 0.0
    %200 = vmatprep.subr.mxu0 0.0
    %201 = vmatpush2.msra.mxu0 0.0
    %202 = vmatprep.subr.mxu0 0.0
    %203 = vmatpush2.msra.mxu0 0.0
    %204 = vmatprep.subr.mxu0 0.0
    %205 = vmatpush2.msra.mxu0 0.0
    %206 = vmatprep.subr.mxu0 0.0
    %207 = vmatpush2.msra.mxu0 0.0
    %208 = vmatprep.subr.mxu0 0.0
    %209 = vmatpush2.msra.mxu0 0.0
    %210 = vmatprep.mubr.f32.mxu0 0.0
    %211 = vmatmul.mubr.f32.gmra.mxu0 %v141
    %v212 = vpop.f32.mrf.mxu0
    %v213 = vadd.f32 0.0, %v212
    %v214 = vpop.f32.mrf.mxu0
    %215 = vdwg.mxu0
    %vm216 = vcmp.gt.f32.partialorder %v213, 1.5
    %v217 = vsel %vm216, 1, 0
    %v218 = vcvt.s32.f32 %v217
    %v219 = vmul.f32 %v129, %v129
    %v220 = vmul.f32 %v134, %v134
    %v221 = vadd.f32 %v219, %v220
    %v222 = vmul.f32 %v124, %v124
    %v223 = vadd.f32 %v221, %v222
    %v224 = vrsqrt.pop %v223
    %v225 = vmul.f32 %v223, %v224
    %vm226 = vcmp.eq.f32.partialorder %v223, inf
    %v227 = vsel %vm226, %v223, %v225
    %vm228 = vcmp.eq.f32.partialorder %v223, 0.0
    %v229 = vand.u32 %v223, 2147483648
    %v230 = vsel %vm228, %v229, %v227
    %v232 = vlaneseq
    %v233 = vshrl.u32 %v232, 7
    %v234 = vsub.s32 0, %v233
    %v235 = vrot.slane %v42, %v234
    %v237 = vmul.f32 %v230, %v235
    %v238 = vmul.f32 %v237, %v218
    %vm239 = vcmask 97280
    %v241 = vsel %vm239, %v218, 0
    %v244 = vsel %vm239, %v238, 0
    %vm246 = vcmask 1043456
    %v248 = vsel %vm246, %v40, 0
    %250 = vmatprep.subr.mxu0 0.0
    %251 = vmatpush1.msra.mxu0 0.0
    %252 = vmatprep.subr.mxu0 0.0
    %253 = vmatpush1.msra.mxu0 0.0
    %254 = vmatprep.subr.mxu0 0.0
    %255 = vmatpush1.msra.mxu0 0.0
    %256 = vmatprep.subr.mxu0 0.0
    %257 = vmatpush1.msra.mxu0 0.0
    %258 = vmatprep.subr.mxu0 0.0
    %259 = vmatpush1.msra.mxu0 0.0
    %260 = vmatprep.subr.mxu0 0.0
    %261 = vmatpush1.msra.mxu0 0.0
    %262 = vmatprep.subr.mxu0 0.0
    %263 = vmatpush1.msra.mxu0 0.0
    %264 = vmatprep.subr.mxu0 0.0
    %265 = vmatpush1.msra.mxu0 0.0
    %266 = vmatprep.subr.mxu0 0.0
    %267 = vmatpush1.msra.mxu0 0.0
    %268 = vmatprep.subr.mxu0 0.0
    %269 = vmatpush1.msra.mxu0 0.0
    %270 = vmatprep.subr.mxu0 0.0
    %271 = vmatpush1.msra.mxu0 0.0
    %272 = vmatprep.subr.mxu0 0.0
    %273 = vmatpush1.msra.mxu0 0.0
    %274 = vmatprep.subr.mxu0 0.0
    %275 = vmatpush1.msra.mxu0 0.0
    %276 = vmatprep.subr.mxu0 0.0
    %277 = vmatpush1.msra.mxu0 0.0
    %278 = vmatprep.subr.mxu0 0.0
    %279 = vmatpush1.msra.mxu0 %v248
    %280 = vmatprep.subr.mxu0 0.0
    %281 = vmatpush1.msra.mxu0 %v39
    %282 = vmatprep.subr.mxu0 0.0
    %283 = vmatpush2.msra.mxu0 0.0
    %284 = vmatprep.subr.mxu0 0.0
    %285 = vmatpush2.msra.mxu0 0.0
    %286 = vmatprep.subr.mxu0 0.0
    %287 = vmatpush2.msra.mxu0 0.0
    %288 = vmatprep.subr.mxu0 0.0
    %289 = vmatpush2.msra.mxu0 0.0
    %290 = vmatprep.subr.mxu0 0.0
    %291 = vmatpush2.msra.mxu0 0.0
    %292 = vmatprep.subr.mxu0 0.0
    %293 = vmatpush2.msra.mxu0 0.0
    %294 = vmatprep.subr.mxu0 0.0
    %295 = vmatpush2.msra.mxu0 0.0
    %296 = vmatprep.subr.mxu0 0.0
    %297 = vmatpush2.msra.mxu0 0.0
    %298 = vmatprep.subr.mxu0 0.0
    %299 = vmatpush2.msra.mxu0 0.0
    %300 = vmatprep.subr.mxu0 0.0
    %301 = vmatpush2.msra.mxu0 0.0
    %302 = vmatprep.subr.mxu0 0.0
    %303 = vmatpush2.msra.mxu0 0.0
    %304 = vmatprep.subr.mxu0 0.0
    %305 = vmatpush2.msra.mxu0 0.0
    %306 = vmatprep.subr.mxu0 0.0
    %307 = vmatpush2.msra.mxu0 0.0
    %308 = vmatprep.subr.mxu0 0.0
    %309 = vmatpush2.msra.mxu0 0.0
    %310 = vmatprep.subr.mxu0 0.0
    %311 = vmatpush2.msra.mxu0 0.0
    %312 = vmatprep.subr.mxu0 0.0
    %313 = vmatpush2.msra.mxu0 0.0
    %314 = vmatprep.mubr.f32.mxu0 0.0
    %315 = vmatmul.mubr.f32.gmra.mxu0 %v241
    %v316 = vpop.f32.mrf.mxu0
    %v317 = vadd.f32 0.0, %v316
    %v318 = vpop.f32.mrf.mxu0
    %319 = vmatprep.mubr.f32.mxu0 0.0
    %320 = vmatmul.mubr.f32.gmra.mxu0 %v244
    %v321 = vpop.f32.mrf.mxu0
    %v322 = vadd.f32 0.0, %v321
    %v323 = vpop.f32.mrf.mxu0
    %324 = vdwg.mxu0
    %vm325 = vcmp.ge.f32.partialorder %v317, 0.5
    %v326 = vmax.f32 %v317, 1.0
    %v327 = vrcp.pop %v326
    %v328 = vmul.f32 %v322, %v327
    %v329 = vsel %vm325, %v328, 0.0
    %vm330 = vcmask 31744
    %v332 = vsel %vm330, %v317, 0
    %v335 = vsel %vm330, %v329, 0
    %v338 = vsel %vm246, %v41, 0
    %340 = vmatprep.subr.mxu0 0.0
    %341 = vmatpush1.msra.mxu0 0.0
    %342 = vmatprep.subr.mxu0 0.0
    %343 = vmatpush1.msra.mxu0 0.0
    %344 = vmatprep.subr.mxu0 0.0
    %345 = vmatpush1.msra.mxu0 0.0
    %346 = vmatprep.subr.mxu0 0.0
    %347 = vmatpush1.msra.mxu0 0.0
    %348 = vmatprep.subr.mxu0 0.0
    %349 = vmatpush1.msra.mxu0 0.0
    %350 = vmatprep.subr.mxu0 0.0
    %351 = vmatpush1.msra.mxu0 0.0
    %352 = vmatprep.subr.mxu0 0.0
    %353 = vmatpush1.msra.mxu0 0.0
    %354 = vmatprep.subr.mxu0 0.0
    %355 = vmatpush1.msra.mxu0 0.0
    %356 = vmatprep.subr.mxu0 0.0
    %357 = vmatpush1.msra.mxu0 0.0
    %358 = vmatprep.subr.mxu0 0.0
    %359 = vmatpush1.msra.mxu0 0.0
    %360 = vmatprep.subr.mxu0 0.0
    %361 = vmatpush1.msra.mxu0 0.0
    %362 = vmatprep.subr.mxu0 0.0
    %363 = vmatpush1.msra.mxu0 0.0
    %364 = vmatprep.subr.mxu0 0.0
    %365 = vmatpush1.msra.mxu0 0.0
    %366 = vmatprep.subr.mxu0 0.0
    %367 = vmatpush1.msra.mxu0 0.0
    %368 = vmatprep.subr.mxu0 0.0
    %369 = vmatpush1.msra.mxu0 0.0
    %370 = vmatprep.subr.mxu0 0.0
    %371 = vmatpush1.msra.mxu0 %v338
    %372 = vmatprep.subr.mxu0 0.0
    %373 = vmatpush2.msra.mxu0 0.0
    %374 = vmatprep.subr.mxu0 0.0
    %375 = vmatpush2.msra.mxu0 0.0
    %376 = vmatprep.subr.mxu0 0.0
    %377 = vmatpush2.msra.mxu0 0.0
    %378 = vmatprep.subr.mxu0 0.0
    %379 = vmatpush2.msra.mxu0 0.0
    %380 = vmatprep.subr.mxu0 0.0
    %381 = vmatpush2.msra.mxu0 0.0
    %382 = vmatprep.subr.mxu0 0.0
    %383 = vmatpush2.msra.mxu0 0.0
    %384 = vmatprep.subr.mxu0 0.0
    %385 = vmatpush2.msra.mxu0 0.0
    %386 = vmatprep.subr.mxu0 0.0
    %387 = vmatpush2.msra.mxu0 0.0
    %388 = vmatprep.subr.mxu0 0.0
    %389 = vmatpush2.msra.mxu0 0.0
    %390 = vmatprep.subr.mxu0 0.0
    %391 = vmatpush2.msra.mxu0 0.0
    %392 = vmatprep.subr.mxu0 0.0
    %393 = vmatpush2.msra.mxu0 0.0
    %394 = vmatprep.subr.mxu0 0.0
    %395 = vmatpush2.msra.mxu0 0.0
    %396 = vmatprep.subr.mxu0 0.0
    %397 = vmatpush2.msra.mxu0 0.0
    %398 = vmatprep.subr.mxu0 0.0
    %399 = vmatpush2.msra.mxu0 0.0
    %400 = vmatprep.subr.mxu0 0.0
    %401 = vmatpush2.msra.mxu0 0.0
    %402 = vmatprep.subr.mxu0 0.0
    %403 = vmatpush2.msra.mxu0 0.0
    %404 = vmatprep.mubr.f32.mxu0 0.0
    %405 = vmatmul.mubr.f32.gmra.mxu0 %v332
    %v406 = vpop.f32.mrf.mxu0
    %v407 = vadd.f32 0.0, %v406
    %v408 = vpop.f32.mrf.mxu0
    %409 = vmatprep.mubr.f32.mxu0 0.0
    %410 = vmatmul.mubr.f32.gmra.mxu0 %v335
    %v411 = vpop.f32.mrf.mxu0
    %v412 = vadd.f32 0.0, %v411
    %v413 = vpop.f32.mrf.mxu0
    %414 = vdwg.mxu0
    %vm415 = vcmp.gt.f32.partialorder %v238, 0.0
    %v416 = vsub.f32 %v238, %v412
    %v417 = vmul.f32 %v416, %v416
    %v418 = vmul.f32 %v417, 0.5
    %v419 = vmax.f32 %v407, 1.0
    %v420 = vrcp.pop %v419
    %v421 = vmul.f32 %v418, %v420
    %v422 = vsel %vm415, %v421, 0.0
    %v423 = vsel %vm43, %v32, 0.0
    %424 = vadd.xlane.f32.xlu0 %v423
    %v425 = vpop.xlane.xlu0 %424
    %vm426 = vcmp.eq.f32.partialorder %v425, 0.0
    %v427 = vsel %vm426, 1, 0
    %v428 = vcvt.s32.f32 %v427
    %v429 = vsel %vm239, %v422, 0.0
    %430 = vadd.xlane.f32.xlu0 %v429
    %v431 = vpop.xlane.xlu0 %430
    %v432 = vmul.f32 %v431, %v428
    %v434 = vlaneseq
    %v435 = vand.u32 %v434, 127
    %v436 = vlaneseq
    %v437 = vshrl.u32 %v436, 7
    %v438 = vsub.s32 %v435, %v437
    %v439 = vrot.slane %v432, %v438
    %vm441 = vcmask 57344
    %442 = vst.msk [vmem:[#allocation2] sm:$0x1] %vm441, %v439
    // Predicated region
    $region26: #{tpu_custom_call.1} parent=1 // pred_check
      _
    $region27: #{tpu_custom_call.1} parent=1 // pred_check_branch
      %444 = sbr.rel (0) target = $region29
    $region28: #{tpu_custom_call.1} parent=1 // pred_region
      %s446 = ssub.s32 16, 16
      %447 = vsyncadd [#allocation3], %s446
      %s449 = sshll.u32 [#allocation2], 4
      %s450 = int_to_ptr.vmem [resolvable:$true] %s449
      %452 = dma.vmem_to_hbm [thread:$0]  %s450, 16, %s6, [#allocation3]
    $region29: #{tpu_custom_call.1} parent=1 // pred_fallthru
      _
    // Predicated region
    $region30: #{tpu_custom_call.1} parent=1 // pred_check
      _
    $region31: #{tpu_custom_call.1} parent=1 // pred_check_branch
      %454 = sbr.rel (0) target = $region33
    $region32: #{tpu_custom_call.1} parent=1 // pred_region
      %455 = dma.done [#allocation3], 16
    $region33: #{tpu_custom_call.1} parent=1 // pred_fallthru
      _
    %456 = vsyncpa [#allocation3], 1

</llo_original>
